<compile_context>
chip_gen: v7x
topology: tpu7x:2x2x1
jax: 0.10.0
libtpu: 0.0.40
codegen_flags: <defaults>
</compile_context>

<pallas_src>
import functools

import jax
import jax.numpy as jnp
from jax import lax
from jax.experimental import pallas as pl
from jax.experimental.pallas import tpu as pltpu


def _dyt_packed_kernel(alpha_ref, w_ref, b_ref, bd_ref, x_ref, o_ref, *, eps, feat):
    """Packed path: each slab row holds 128//feat independent logical rows."""
    x = x_ref[...].astype(jnp.float32)          # (T, 128)
    bd = bd_ref[...]                            # (128, 128) block-diagonal ones
    alpha = alpha_ref[0]                        # scalar from SMEM
    inv_n = jnp.float32(1.0 / feat)
    inv_nm1 = jnp.float32(1.0 / (feat - 1)) if feat > 1 else jnp.float32(float("nan"))

    # Segmented sums via MXU (block-diag ones matrix, exact 0/1 entries,
    # HIGHEST precision keeps the f32 mantissa).  Two-pass: mean, then (x-mean)^2.
    sum_b = jnp.dot(x, bd, precision=lax.Precision.HIGHEST,
                    preferred_element_type=jnp.float32)
    mean_b = sum_b * inv_n
    diff = x - mean_b
    sumsq_b = jnp.dot(diff * diff, bd, precision=lax.Precision.HIGHEST,
                      preferred_element_type=jnp.float32)
    std_b = jnp.sqrt(sumsq_b * inv_nm1)
    denom = std_b + jnp.float32(eps)
    # EUP approx reciprocal + one Newton step (~2^-24 relative error).
    r = pl.reciprocal(denom, approx=True)
    r = r * (jnp.float32(2.0) - denom * r)
    y = jnp.tanh((alpha * r) * diff)
    o_ref[...] = (y * w_ref[...] + b_ref[...]).astype(o_ref.dtype)   # single dense store


def _dyt_rowwise_kernel(alpha_ref, w_ref, b_ref, x_ref, o_ref, *, eps, feat):
    """Unpacked path (feat >= 128, or feat not dividing 128)."""
    x = x_ref[...].astype(jnp.float32)          # (T, feat)
    alpha = alpha_ref[0]
    inv_nm1 = jnp.float32(1.0 / (feat - 1)) if feat > 1 else jnp.float32(float("nan"))

    mean = jnp.mean(x, axis=-1, keepdims=True)
    diff = x - mean
    std = jnp.sqrt(jnp.sum(diff * diff, axis=-1, keepdims=True) * inv_nm1)
    denom = std + jnp.float32(eps)
    r = pl.reciprocal(denom, approx=True)       # (T, 1): negligible either way
    r = r * (jnp.float32(2.0) - denom * r)
    y = jnp.tanh((alpha * r) * diff)
    o_ref[...] = (y * w_ref[...] + b_ref[...]).astype(o_ref.dtype)


def _vmem_limit_bytes():
    """Generation-aware scoped-VMEM request: <= half of physical, <= 64 MiB."""
    try:
        phys = int(pltpu.get_tpu_info().vmem_capacity_bytes)
    except Exception:
        phys = 64 * 1024 * 1024                 # conservative fallback (-> 32 MiB)
    return max(32 * 1024 * 1024, min(64 * 1024 * 1024, phys // 2))


def dyt_forward(x, alpha, weight, bias, *, eps=1e-5, block_bytes=None):
    """x: (..., F); alpha: scalar or (1,); weight, bias: (F,)."""
    orig_shape = x.shape
    feat = int(orig_shape[-1])
    rows = 1
    for d in orig_shape[:-1]:
        rows *= int(d)

    # --- lane packing ------------------------------------------------------
    if feat < 128 and 128 % feat == 0:
        groups = 128 // feat
    else:
        groups = 1
    lanes = groups * feat

    x2 = x.reshape(rows, feat)
    if groups > 1:
        pad_to = groups * 8                     # packed row count multiple of 8
        pad_rows = (-rows) % pad_to
        if pad_rows:
            x2 = jnp.concatenate(
                [x2, jnp.zeros((pad_rows, feat), x2.dtype)], axis=0)
    else:
        pad_rows = 0
    prows = (rows + pad_rows) // groups
    x2 = x2.reshape(prows, lanes)

    w2 = jnp.tile(weight.astype(jnp.float32).reshape(-1), groups).reshape(1, lanes)
    b2 = jnp.tile(bias.astype(jnp.float32).reshape(-1), groups).reshape(1, lanes)
    alpha1 = jnp.asarray(alpha, dtype=jnp.float32).reshape(-1)[:1]

    # --- tiling ------------------------------------------------------------
    vmem_limit = _vmem_limit_bytes()
    if block_bytes is None:
        # f32-footprint sizing; ~1/10 of the scoped limit leaves room for
        # 2x(in+out) pipeline buffers plus ~3 live full-width f32 intermediates.
        block_bytes = max(1 << 20, min(8 << 20, vmem_limit // 10))

    row_bytes_f32 = lanes * 4
    tile_rows = max(16, (int(block_bytes) // row_bytes_f32) // 16 * 16)
    in_bytes = prows * lanes * jnp.dtype(x.dtype).itemsize
    if in_bytes > (1 << 20):
        # At least 2 grid steps: v7x has 2 TensorCores, and a single block
        # would also serialize DMA-in -> compute -> DMA-out.
        two_step = max(16, (((prows + 1) // 2) + 15) // 16 * 16)
        tile_rows = min(tile_rows, two_step)
    if tile_rows >= prows:
        tile_rows = prows                       # single full-extent block (tiny input)
    grid = (pl.cdiv(prows, tile_rows),)

    common_specs = [
        pl.BlockSpec(memory_space=pltpu.MemorySpace.SMEM),     # alpha (scalar)
        pl.BlockSpec((1, lanes), lambda i: (0, 0)),            # weight (resident)
        pl.BlockSpec((1, lanes), lambda i: (0, 0)),            # bias   (resident)
    ]
    x_spec = pl.BlockSpec((tile_rows, lanes), lambda i: (i, 0))
    out_spec = pl.BlockSpec((tile_rows, lanes), lambda i: (i, 0))

    if groups > 1:
        seg = jnp.arange(lanes, dtype=jnp.int32) // feat
        bd = (seg[:, None] == seg[None, :]).astype(jnp.float32)  # block-diag ones
        kernel = functools.partial(_dyt_packed_kernel, eps=eps, feat=feat)
        in_specs = common_specs + [
            pl.BlockSpec((lanes, lanes), lambda i: (0, 0)),       # block-diag (resident)
            x_spec,
        ]
        args = (alpha1, w2, b2, bd, x2)
    else:
        kernel = functools.partial(_dyt_rowwise_kernel, eps=eps, feat=feat)
        in_specs = common_specs + [x_spec]
        args = (alpha1, w2, b2, x2)

    out = pl.pallas_call(
        kernel,
        out_shape=jax.ShapeDtypeStruct((prows, lanes), x.dtype),
        grid_spec=pltpu.PrefetchScalarGridSpec(
            num_scalar_prefetch=0,
            grid=grid,
            in_specs=in_specs,
            out_specs=out_spec,
        ),
        compiler_params=pltpu.CompilerParams(
            dimension_semantics=("parallel",),
            vmem_limit_bytes=vmem_limit,
        ),
    )(*args)

    out = out.reshape(prows * groups, feat)
    if pad_rows:
        out = out[:rows]
    return out.reshape(orig_shape)


if __name__ == "__main__":
    key = jax.random.PRNGKey(0)

    batch, seq, num_features = 2, 8, 32
    x = jax.random.normal(key, (batch, seq, num_features), dtype=jnp.float32)

    # Deterministic parameter init (matches DyT.__init__):
    alpha = jnp.full((1,), 0.5, dtype=jnp.float32)       # alpha_init_value = 0.5
    weight = jnp.ones((num_features,), dtype=jnp.float32)
    bias = jnp.zeros((num_features,), dtype=jnp.float32)

    fwd = jax.jit(functools.partial(dyt_forward, eps=1e-5))
    out = fwd(x, alpha, weight, bias)
    jax.block_until_ready(out)

    # Reference check in plain JAX (same semantics as the PyTorch module).
    mean = jnp.mean(x, axis=-1, keepdims=True)
    std = jnp.sqrt(jnp.sum((x - mean) ** 2, axis=-1, keepdims=True)
                   / (num_features - 1))
    ref = jnp.tanh(alpha * (x - mean) / (std + 1e-5)) * weight + bias
    err = float(jnp.max(jnp.abs(out - ref)))
    assert jnp.allclose(out, ref, atol=3e-5, rtol=3e-5), err

    print("KERNEL_OK")
</pallas_src>

<mosaic_0001>
module attributes {stable_mosaic.version = 11 : i64} {
  func.func @_dyt_packed_kernel(%arg0: i32, %arg1: memref<1xf32, #tpu.memory_space<smem>>, %arg2: memref<1x128xf32, #tpu.memory_space<vmem>>, %arg3: memref<1x128xf32, #tpu.memory_space<vmem>>, %arg4: memref<128x128xf32, #tpu.memory_space<vmem>>, %arg5: memref<8x128xf32, #tpu.memory_space<vmem>>, %arg6: memref<8x128xf32, #tpu.memory_space<vmem>>) attributes {dimension_semantics = [#tpu.dimension_semantics<parallel>], iteration_bounds = array<i64: 1>, scalar_prefetch = 0 : i64, scratch_operands = 0 : i64, tpu.core_type = #tpu.core_type<tc>, window_params = [{transform_indices = @transform_0, window_bounds = array<i64: 1>}, {pipeline_mode = #tpu.pipeline_mode<synchronous>, transform_indices = @transform_1, window_bounds = array<i64: 1, 128>}, {pipeline_mode = #tpu.pipeline_mode<synchronous>, transform_indices = @transform_2, window_bounds = array<i64: 1, 128>}, {pipeline_mode = #tpu.pipeline_mode<synchronous>, transform_indices = @transform_3, window_bounds = array<i64: 128, 128>}, {transform_indices = @transform_4, window_bounds = array<i64: 8, 128>}, {transform_indices = @transform_5, window_bounds = array<i64: 8, 128>}]} {
    %c0 = arith.constant 0 : index
    %c0_0 = arith.constant 0 : index
    %0 = vector.load %arg5[%c0, %c0_0] : memref<8x128xf32, #tpu.memory_space<vmem>>, vector<8x128xf32>
    %c0_1 = arith.constant 0 : index
    %c0_2 = arith.constant 0 : index
    %1 = vector.load %arg4[%c0_1, %c0_2] : memref<128x128xf32, #tpu.memory_space<vmem>>, vector<128x128xf32>
    %c0_3 = arith.constant 0 : index
    %2 = memref.load %arg1[%c0_3] : memref<1xf32, #tpu.memory_space<smem>>
    %cst = arith.constant dense<0.000000e+00> : vector<8x128xf32>
    %3 = tpu.matmul %0, %1, %cst {dimension_numbers = #tpu.dot_dimension_numbers<[1], [0], [0], [1], [0, 0, 1, 1], [], []>, precision = #tpu.contract_precision<fp32>} : vector<8x128xf32>, vector<128x128xf32>, vector<8x128xf32> -> vector<8x128xf32>
    %cst_4 = arith.constant 3.125000e-02 : f32
    %4 = vector.broadcast %cst_4 : f32 to vector<8x128xf32>
    %5 = arith.mulf %3, %4 : vector<8x128xf32>
    %6 = arith.subf %0, %5 : vector<8x128xf32>
    %7 = arith.mulf %6, %6 : vector<8x128xf32>
    %cst_5 = arith.constant dense<0.000000e+00> : vector<8x128xf32>
    %8 = tpu.matmul %7, %1, %cst_5 {dimension_numbers = #tpu.dot_dimension_numbers<[1], [0], [0], [1], [0, 0, 1, 1], [], []>, precision = #tpu.contract_precision<fp32>} : vector<8x128xf32>, vector<128x128xf32>, vector<8x128xf32> -> vector<8x128xf32>
    %cst_6 = arith.constant 0.0322580636 : f32
    %9 = vector.broadcast %cst_6 : f32 to vector<8x128xf32>
    %10 = arith.mulf %8, %9 : vector<8x128xf32>
    %11 = math.sqrt %10 : vector<8x128xf32>
    %cst_7 = arith.constant 9.99999974E-6 : f32
    %12 = vector.broadcast %cst_7 : f32 to vector<8x128xf32>
    %13 = arith.addf %11, %12 : vector<8x128xf32>
    %14 = tpu.reciprocal %13 {approx = true} : vector<8x128xf32> -> vector<8x128xf32>
    %15 = arith.mulf %13, %14 : vector<8x128xf32>
    %cst_8 = arith.constant 2.000000e+00 : f32
    %16 = vector.broadcast %cst_8 : f32 to vector<8x128xf32>
    %17 = arith.subf %16, %15 : vector<8x128xf32>
    %18 = arith.mulf %14, %17 : vector<8x128xf32>
    %19 = vector.broadcast %2 : f32 to vector<8x128xf32>
    %20 = arith.mulf %19, %18 : vector<8x128xf32>
    %21 = arith.mulf %20, %6 : vector<8x128xf32>
    %22 = math.tanh %21 : vector<8x128xf32>
    %c0_9 = arith.constant 0 : index
    %c0_10 = arith.constant 0 : index
    %23 = vector.load %arg2[%c0_9, %c0_10] : memref<1x128xf32, #tpu.memory_space<vmem>>, vector<1x128xf32>
    %24 = vector.broadcast %23 : vector<1x128xf32> to vector<8x128xf32>
    %25 = arith.mulf %22, %24 : vector<8x128xf32>
    %c0_11 = arith.constant 0 : index
    %c0_12 = arith.constant 0 : index
    %26 = vector.load %arg3[%c0_11, %c0_12] : memref<1x128xf32, #tpu.memory_space<vmem>>, vector<1x128xf32>
    %27 = vector.broadcast %26 : vector<1x128xf32> to vector<8x128xf32>
    %28 = arith.addf %25, %27 : vector<8x128xf32>
    %c0_13 = arith.constant 0 : index
    %c0_14 = arith.constant 0 : index
    %29 = vector.load %arg6[%c0_13, %c0_14] : memref<8x128xf32, #tpu.memory_space<vmem>>, vector<8x128xf32>
    tpu.vector_store %arg6[%c0_13, %c0_14], %28 {strides = array<i32>} : memref<8x128xf32, #tpu.memory_space<vmem>>, vector<8x128xf32>,
    return
  }
  func.func @transform_0(%arg0: i32) -> i32 {
    %c0_i32 = arith.constant 0 : i32
    %c0_i32_0 = arith.constant 0 : i32
    return %c0_i32 : i32
  }
  func.func @transform_1(%arg0: i32) -> (i32, i32) {
    %c0_i32 = arith.constant 0 : i32
    %c0_i32_0 = arith.constant 0 : i32
    %c0_i32_1 = arith.constant 0 : i32
    return %c0_i32, %c0_i32_0 : i32, i32
  }
  func.func @transform_2(%arg0: i32) -> (i32, i32) {
    %c0_i32 = arith.constant 0 : i32
    %c0_i32_0 = arith.constant 0 : i32
    %c0_i32_1 = arith.constant 0 : i32
    return %c0_i32, %c0_i32_0 : i32, i32
  }
  func.func @transform_3(%arg0: i32) -> (i32, i32) {
    %c0_i32 = arith.constant 0 : i32
    %c0_i32_0 = arith.constant 0 : i32
    %c0_i32_1 = arith.constant 0 : i32
    return %c0_i32, %c0_i32_0 : i32, i32
  }
  func.func @transform_4(%arg0: i32) -> (i32, i32) {
    %c0_i32 = arith.constant 0 : i32
    %c0_i32_0 = arith.constant 0 : i32
    return %arg0, %c0_i32 : i32, i32
  }
  func.func @transform_5(%arg0: i32) -> (i32, i32) {
    %c0_i32 = arith.constant 0 : i32
    %c0_i32_0 = arith.constant 0 : i32
    return %arg0, %c0_i32 : i32, i32
  }
}

</mosaic_0001>

<llo_original>
// kernel: tile.13
$region0: #{tile.13}
  #allocation0 [shape = 's32[1]{0}', space=sflag, size = 0x4, scoped, tag = 'scoped memory for tile.13']
  %s0 = inlined_call_operand.vmem [shape: f32[32], index: 0, kind: input, shape index: {}]
  %s1 = inlined_call_operand.vmem [shape: f32[4,32], index: 1, kind: output, shape index: {}]
  // Predicated region
  $region2: #{tile.13} parent=0 // pred_check
    _
  $region3: #{tile.13} parent=0 // pred_check_branch
    %3 = sbr.rel (0) target = $region5
  $region4: #{tile.13} parent=0 // pred_region
    _
  $region5: #{tile.13} parent=0 // pred_fallthru
    _
  %v4 = vld [vmem:[%s0] ss:$0 sm:$0xff]
  %5 = vst [vmem:[%s1] sm:$0xf] %v4

// kernel: tile.14
$region0: #{tile.14}
  %s0 = inlined_call_operand.vmem [shape: f32[4,32], index: 0, kind: input, shape index: {}]
  %s1 = inlined_call_operand.vmem [shape: f32[1,128], index: 1, kind: output, shape index: {}]
  $region1: #{tile.14} parent=0
    #allocation0 [shape = 'u8[4096]{0}', space=vmem, size = 0x1000, scoped, tag = 'scoped mem for output reshape']
    #allocation1 [shape = 'u8[4096]{0}', space=vmem, size = 0x1000, scoped, tag = 'scoped mem for input reshape']
    %s3 = sshllo.u32 0, 4
    %v4 = vld [vmem:[%s0] sm:%s3]
    %5 = vst [vmem:[#allocation1] sm:%s3] %v4
    %v6 = vld [vmem:[#allocation1] sm:$0x1]
    %vm7 = vcmask 261120
    %8 = vst.msk [vmem:[#allocation0] sm:$0x1] %vm7, %v6
    %s9 = scalar_lea.vmem [#allocation1], 3
    %v10 = vld [vmem:[%s9] sm:$0x1]
    %11 = vrot.lane.b32.xlu0 %v10, 96
    %v12 = vpop.permute.xlu0 %11
    %vm13 = vcmask 1048320
    %14 = vst.msk [vmem:[#allocation0] sm:$0x1] %vm13, %v12
    %s15 = scalar_lea.vmem [#allocation1], 2
    %v16 = vld [vmem:[%s15] sm:$0x1]
    %17 = vrot.lane.b32.xlu0 %v16, 64
    %v18 = vpop.permute.xlu0 %17
    %vm19 = vcmask 785920
    %20 = vst.msk [vmem:[#allocation0] sm:$0x1] %vm19, %v18
    %s21 = scalar_lea.vmem [#allocation1], 1
    %v22 = vld [vmem:[%s21] sm:$0x1]
    %23 = vrot.lane.b32.xlu0 %v22, 32
    %v24 = vpop.permute.xlu0 %23
    %vm25 = vcmask 523520
    %26 = vst.msk [vmem:[#allocation0] sm:$0x1] %vm25, %v24
    %s28 = sshllo.u32 0, 1
    %v30 = vld [vmem:[#allocation0] sm:%s28]
    %s31 = sshllo.u32 0, 1
    %32 = vst [vmem:[%s1] sm:%s31] %v30

// kernel: dyt_forward.1
$region0: #{dyt_forward.1}
  #allocation0 [shape = 'u32[]', space=smem, size = 0x4, offset = 0x4, fixed_abs, tag = 'smem constant byte address 0x4 - core index']
  #allocation1 [shape = 'u32[144,128]{1,0:T(1,128)}', space=vmem, size = 0x12000, scoped, tag = 'internal scratch']
  #allocation2 [shape = 'f32[1]{0:T(128)S(6)}', space=smem, size = 0x200, scoped, tag = 'scoped memory for dyt_forward.1']
  %s0 = inlined_call_operand.<no memory space> [shape: f32[1], index: 0, kind: input, shape index: {}]
  %s1 = inlined_call_operand.vmem [shape: f32[1,128], index: 1, kind: input, shape index: {}]
  %s2 = inlined_call_operand.vmem [shape: f32[1,128], index: 2, kind: input, shape index: {}]
  %s3 = inlined_call_operand.vmem [shape: f32[128,128], index: 3, kind: input, shape index: {}]
  %s4 = inlined_call_operand.vmem [shape: f32[8,128], index: 4, kind: input, shape index: {}]
  %s5 = inlined_call_operand.vmem [shape: f32[8,128], index: 5, kind: output, shape index: {}]
  %s6 = sld [smem:[#allocation0]]
  $region30: #{dyt_forward.1} parent=0
    _
  %s8 = ssub.s32 1, %s6
  %s9 = scalar_select 0, %s8, %s6
  %10 = sst [smem:[#allocation2]] %s0
  // Predicated region
  $region2: #{dyt_forward.1} parent=0 // pred_check
    _
  $region3: #{dyt_forward.1} parent=0 // pred_check_branch
    %12 = sbr.rel (0) target = $region5
  $region4: #{dyt_forward.1} parent=0 // pred_region
    _
  $region5: #{dyt_forward.1} parent=0 // pred_fallthru
    _
  // Predicated region
  $region6: #{dyt_forward.1} parent=0 // pred_check
    _
  $region7: #{dyt_forward.1} parent=0 // pred_check_branch
    %14 = sbr.rel (0) target = $region9
  $region8: #{dyt_forward.1} parent=0 // pred_region
    _
  $region9: #{dyt_forward.1} parent=0 // pred_fallthru
    _
  // Predicated region
  $region10: #{dyt_forward.1} parent=0 // pred_check
    _
  $region11: #{dyt_forward.1} parent=0 // pred_check_branch
    %16 = sbr.rel (0) target = $region13
  $region12: #{dyt_forward.1} parent=0 // pred_region
    _
  $region13: #{dyt_forward.1} parent=0 // pred_fallthru
    _
  // Predicated region
  $region14: #{dyt_forward.1} parent=0 // pred_check
    _
  $region15: #{dyt_forward.1} parent=0 // pred_check_branch
    %18 = sbr.rel (0) target = $region17
  $region16: #{dyt_forward.1} parent=0 // pred_region
    _
  $region17: #{dyt_forward.1} parent=0 // pred_fallthru
    _
  // Predicated region
  $region18: #{dyt_forward.1} parent=0 // pred_check
    _
  $region19: #{dyt_forward.1} parent=0 // pred_check_branch
    %20 = sbr.rel (0) target = $region21
  $region20: #{dyt_forward.1} parent=0 // pred_region
    _
  $region21: #{dyt_forward.1} parent=0 // pred_fallthru
    _
  %v21 = vld [vmem:[%s4] sm:$0xff]
  %v22 = vld [vmem:[%s3] sm:$0xff]
  %v23 = vld [vmem:[%s3 + $0x8] sm:$0xff]
  %v24 = vld [vmem:[%s3 + $0x10] sm:$0xff]
  %v25 = vld [vmem:[%s3 + $0x18] sm:$0xff]
  %v26 = vld [vmem:[%s3 + $0x20] sm:$0xff]
  %v27 = vld [vmem:[%s3 + $0x28] sm:$0xff]
  %v28 = vld [vmem:[%s3 + $0x30] sm:$0xff]
  %v29 = vld [vmem:[%s3 + $0x38] sm:$0xff]
  %v30 = vld [vmem:[%s3 + $0x40] sm:$0xff]
  %v31 = vld [vmem:[%s3 + $0x48] sm:$0xff]
  %v32 = vld [vmem:[%s3 + $0x50] sm:$0xff]
  %v33 = vld [vmem:[%s3 + $0x58] sm:$0xff]
  %v34 = vld [vmem:[%s3 + $0x60] sm:$0xff]
  %v35 = vld [vmem:[%s3 + $0x68] sm:$0xff]
  %v36 = vld [vmem:[%s3 + $0x70] sm:$0xff]
  %v37 = vld [vmem:[%s3 + $0x78] sm:$0xff]
  %s38 = sld [smem:[#allocation2]]
  %39 = vmatprep.subr.mxu0 0.0
  %v40 = vand.u32 %v22, 4294901760
  %41 = vmatpush1.msra.mxu0 %v40
  %42 = vmatprep.subr.mxu0 0.0
  %v43 = vand.u32 %v23, 4294901760
  %44 = vmatpush1.msra.mxu0 %v43
  %45 = vmatprep.subr.mxu0 0.0
  %v46 = vand.u32 %v24, 4294901760
  %47 = vmatpush1.msra.mxu0 %v46
  %48 = vmatprep.subr.mxu0 0.0
  %v49 = vand.u32 %v25, 4294901760
  %50 = vmatpush1.msra.mxu0 %v49
  %51 = vmatprep.subr.mxu0 0.0
  %v52 = vand.u32 %v26, 4294901760
  %53 = vmatpush1.msra.mxu0 %v52
  %54 = vmatprep.subr.mxu0 0.0
  %v55 = vand.u32 %v27, 4294901760
  %56 = vmatpush1.msra.mxu0 %v55
  %57 = vmatprep.subr.mxu0 0.0
  %v58 = vand.u32 %v28, 4294901760
  %59 = vmatpush1.msra.mxu0 %v58
  %60 = vmatprep.subr.mxu0 0.0
  %v61 = vand.u32 %v29, 4294901760
  %62 = vmatpush1.msra.mxu0 %v61
  %63 = vmatprep.subr.mxu0 0.0
  %v64 = vand.u32 %v30, 4294901760
  %65 = vmatpush1.msra.mxu0 %v64
  %66 = vmatprep.subr.mxu0 0.0
  %v67 = vand.u32 %v31, 4294901760
  %68 = vmatpush1.msra.mxu0 %v67
  %69 = vmatprep.subr.mxu0 0.0
  %v70 = vand.u32 %v32, 4294901760
  %71 = vmatpush1.msra.mxu0 %v70
  %72 = vmatprep.subr.mxu0 0.0
  %v73 = vand.u32 %v33, 4294901760
  %74 = vmatpush1.msra.mxu0 %v73
  %75 = vmatprep.subr.mxu0 0.0
  %v76 = vand.u32 %v34, 4294901760
  %77 = vmatpush1.msra.mxu0 %v76
  %78 = vmatprep.subr.mxu0 0.0
  %v79 = vand.u32 %v35, 4294901760
  %80 = vmatpush1.msra.mxu0 %v79
  %81 = vmatprep.subr.mxu0 0.0
  %v82 = vand.u32 %v36, 4294901760
  %83 = vmatpush1.msra.mxu0 %v82
  %84 = vmatprep.subr.mxu0 0.0
  %v85 = vand.u32 %v37, 4294901760
  %86 = vmatpush1.msra.mxu0 %v85
  %87 = vmatprep.subr.mxu0 0.0
  %88 = vmatpush1.msra.mxu0 0.0
  %89 = vmatprep.subr.mxu0 0.0
  %90 = vmatpush1.msra.mxu0 0.0
  %91 = vmatprep.subr.mxu0 0.0
  %92 = vmatpush1.msra.mxu0 0.0
  %93 = vmatprep.subr.mxu0 0.0
  %94 = vmatpush1.msra.mxu0 0.0
  %95 = vmatprep.subr.mxu0 0.0
  %96 = vmatpush1.msra.mxu0 0.0
  %97 = vmatprep.subr.mxu0 0.0
  %98 = vmatpush1.msra.mxu0 0.0
  %99 = vmatprep.subr.mxu0 0.0
  %100 = vmatpush1.msra.mxu0 0.0
  %101 = vmatprep.subr.mxu0 0.0
  %102 = vmatpush1.msra.mxu0 0.0
  %103 = vmatprep.subr.mxu0 0.0
  %104 = vmatpush1.msra.mxu0 0.0
  %105 = vmatprep.subr.mxu0 0.0
  %106 = vmatpush1.msra.mxu0 0.0
  %107 = vmatprep.subr.mxu0 0.0
  %108 = vmatpush1.msra.mxu0 0.0
  %109 = vmatprep.subr.mxu0 0.0
  %110 = vmatpush1.msra.mxu0 0.0
  %111 = vmatprep.subr.mxu0 0.0
  %112 = vmatpush1.msra.mxu0 0.0
  %113 = vmatprep.subr.mxu0 0.0
  %114 = vmatpush1.msra.mxu0 0.0
  %115 = vmatprep.subr.mxu0 0.0
  %116 = vmatpush1.msra.mxu0 0.0
  %117 = vmatprep.subr.mxu0 0.0
  %118 = vmatpush1.msra.mxu0 0.0
  %119 = vmatprep.mubr.f32.mxu0 0.0
  %v120 = vand.u32 %v21, 4294901760
  %v121 = vsub.f32 %v21, %v120
  %v122 = vand.u32 %v121, 4294901760
  %v123 = vsub.f32 %v121, %v122
  %v124 = vand.u32 %v123, 4294901760
  %125 = vmatmul.mubr.f32.gmra.mrb[0].mxu0 %v124
  %v126 = vpop.f32.mrb[0].mxu0
  %v127 = vadd.f32 0.0, %v126
  %v128 = vpop.f32.mrb[0].mxu0
  %129 = vdwg.mxu0
  %130 = vmatprep.subr.mxu0 0.0
  %v131 = vand.u32 %v22, 4294901760
  %v132 = vsub.f32 %v22, %v131
  %v133 = vand.u32 %v132, 4294901760
  %v134 = vsub.f32 %v132, %v133
  %v135 = vand.u32 %v134, 4294901760
  %136 = vmatpush1.msra.mxu0 %v135
  %137 = vmatprep.subr.mxu0 0.0
  %v138 = vand.u32 %v23, 4294901760
  %v139 = vsub.f32 %v23, %v138
  %v140 = vand.u32 %v139, 4294901760
  %v141 = vsub.f32 %v139, %v140
  %v142 = vand.u32 %v141, 4294901760
  %143 = vmatpush1.msra.mxu0 %v142
  %144 = vmatprep.subr.mxu0 0.0
  %v145 = vand.u32 %v24, 4294901760
  %v146 = vsub.f32 %v24, %v145
  %v147 = vand.u32 %v146, 4294901760
  %v148 = vsub.f32 %v146, %v147
  %v149 = vand.u32 %v148, 4294901760
  %150 = vmatpush1.msra.mxu0 %v149
  %151 = vmatprep.subr.mxu0 0.0
  %v152 = vand.u32 %v25, 4294901760
  %v153 = vsub.f32 %v25, %v152
  %v154 = vand.u32 %v153, 4294901760
  %v155 = vsub.f32 %v153, %v154
  %v156 = vand.u32 %v155, 4294901760
  %157 = vmatpush1.msra.mxu0 %v156
  %158 = vmatprep.subr.mxu0 0.0
  %v159 = vand.u32 %v26, 4294901760
  %v160 = vsub.f32 %v26, %v159
  %v161 = vand.u32 %v160, 4294901760
  %v162 = vsub.f32 %v160, %v161
  %v163 = vand.u32 %v162, 4294901760
  %164 = vmatpush1.msra.mxu0 %v163
  %165 = vmatprep.subr.mxu0 0.0
  %v166 = vand.u32 %v27, 4294901760
  %v167 = vsub.f32 %v27, %v166
  %v168 = vand.u32 %v167, 4294901760
  %v169 = vsub.f32 %v167, %v168
  %v170 = vand.u32 %v169, 4294901760
  %171 = vmatpush1.msra.mxu0 %v170
  %172 = vmatprep.subr.mxu0 0.0
  %v173 = vand.u32 %v28, 4294901760
  %v174 = vsub.f32 %v28, %v173
  %v175 = vand.u32 %v174, 4294901760
  %v176 = vsub.f32 %v174, %v175
  %v177 = vand.u32 %v176, 4294901760
  %178 = vmatpush1.msra.mxu0 %v177
  %179 = vmatprep.subr.mxu0 0.0
  %v180 = vand.u32 %v29, 4294901760
  %v181 = vsub.f32 %v29, %v180
  %v182 = vand.u32 %v181, 4294901760
  %v183 = vsub.f32 %v181, %v182
  %v184 = vand.u32 %v183, 4294901760
  %185 = vmatpush1.msra.mxu0 %v184
  %186 = vmatprep.subr.mxu0 0.0
  %v187 = vand.u32 %v30, 4294901760
  %v188 = vsub.f32 %v30, %v187
  %v189 = vand.u32 %v188, 4294901760
  %v190 = vsub.f32 %v188, %v189
  %v191 = vand.u32 %v190, 4294901760
  %192 = vmatpush1.msra.mxu0 %v191
  %193 = vmatprep.subr.mxu0 0.0
  %v194 = vand.u32 %v31, 4294901760
  %v195 = vsub.f32 %v31, %v194
  %v196 = vand.u32 %v195, 4294901760
  %v197 = vsub.f32 %v195, %v196
  %v198 = vand.u32 %v197, 4294901760
  %199 = vmatpush1.msra.mxu0 %v198
  %200 = vmatprep.subr.mxu0 0.0
  %v201 = vand.u32 %v32, 4294901760
  %v202 = vsub.f32 %v32, %v201
  %v203 = vand.u32 %v202, 4294901760
  %v204 = vsub.f32 %v202, %v203
  %v205 = vand.u32 %v204, 4294901760
  %206 = vmatpush1.msra.mxu0 %v205
  %207 = vmatprep.subr.mxu0 0.0
  %v208 = vand.u32 %v33, 4294901760
  %v209 = vsub.f32 %v33, %v208
  %v210 = vand.u32 %v209, 4294901760
  %v211 = vsub.f32 %v209, %v210
  %v212 = vand.u32 %v211, 4294901760
  %213 = vmatpush1.msra.mxu0 %v212
  %214 = vmatprep.subr.mxu0 0.0
  %v215 = vand.u32 %v34, 4294901760
  %v216 = vsub.f32 %v34, %v215
  %v217 = vand.u32 %v216, 4294901760
  %v218 = vsub.f32 %v216, %v217
  %v219 = vand.u32 %v218, 4294901760
  %220 = vmatpush1.msra.mxu0 %v219
  %221 = vmatprep.subr.mxu0 0.0
  %v222 = vand.u32 %v35, 4294901760
  %v223 = vsub.f32 %v35, %v222
  %v224 = vand.u32 %v223, 4294901760
  %v225 = vsub.f32 %v223, %v224
  %v226 = vand.u32 %v225, 4294901760
  %227 = vmatpush1.msra.mxu0 %v226
  %228 = vmatprep.subr.mxu0 0.0
  %v229 = vand.u32 %v36, 4294901760
  %v230 = vsub.f32 %v36, %v229
  %v231 = vand.u32 %v230, 4294901760
  %v232 = vsub.f32 %v230, %v231
  %v233 = vand.u32 %v232, 4294901760
  %234 = vmatpush1.msra.mxu0 %v233
  %235 = vmatprep.subr.mxu0 0.0
  %v236 = vand.u32 %v37, 4294901760
  %v237 = vsub.f32 %v37, %v236
  %v238 = vand.u32 %v237, 4294901760
  %v239 = vsub.f32 %v237, %v238
  %v240 = vand.u32 %v239, 4294901760
  %241 = vmatpush1.msra.mxu0 %v240
  %242 = vmatprep.subr.mxu0 0.0
  %243 = vmatpush1.msra.mxu0 0.0
  %244 = vmatprep.subr.mxu0 0.0
  %245 = vmatpush1.msra.mxu0 0.0
  %246 = vmatprep.subr.mxu0 0.0
  %247 = vmatpush1.msra.mxu0 0.0
  %248 = vmatprep.subr.mxu0 0.0
  %249 = vmatpush1.msra.mxu0 0.0
  %250 = vmatprep.subr.mxu0 0.0
  %251 = vmatpush1.msra.mxu0 0.0
  %252 = vmatprep.subr.mxu0 0.0
  %253 = vmatpush1.msra.mxu0 0.0
  %254 = vmatprep.subr.mxu0 0.0
  %255 = vmatpush1.msra.mxu0 0.0
  %256 = vmatprep.subr.mxu0 0.0
  %257 = vmatpush1.msra.mxu0 0.0
  %258 = vmatprep.subr.mxu0 0.0
  %259 = vmatpush1.msra.mxu0 0.0
  %260 = vmatprep.subr.mxu0 0.0
  %261 = vmatpush1.msra.mxu0 0.0
  %262 = vmatprep.subr.mxu0 0.0
  %263 = vmatpush1.msra.mxu0 0.0
  %264 = vmatprep.subr.mxu0 0.0
  %265 = vmatpush1.msra.mxu0 0.0
  %266 = vmatprep.subr.mxu0 0.0
  %267 = vmatpush1.msra.mxu0 0.0
  %268 = vmatprep.subr.mxu0 0.0
  %269 = vmatpush1.msra.mxu0 0.0
  %270 = vmatprep.subr.mxu0 0.0
  %271 = vmatpush1.msra.mxu0 0.0
  %272 = vmatprep.subr.mxu0 0.0
  %273 = vmatpush1.msra.mxu0 0.0
  %274 = vmatprep.mubr.f32.mxu0 0.0
  %v275 = vand.u32 %v21, 4294901760
  %276 = vmatmul.mubr.f32.gmra.mrb[0].mxu0 %v275
  %v277 = vpop.f32.mrb[0].mxu0
  %v278 = vadd.f32 %v127, %v277
  %v279 = vpop.f32.mrb[0].mxu0
  %280 = vdwg.mxu0
  %281 = vmatprep.subr.mxu0 0.0
  %v282 = vand.u32 %v22, 4294901760
  %v283 = vsub.f32 %v22, %v282
  %284 = vmatpush1.msra.mxu0 %v283
  %285 = vmatprep.subr.mxu0 0.0
  %v286 = vand.u32 %v23, 4294901760
  %v287 = vsub.f32 %v23, %v286
  %288 = vmatpush1.msra.mxu0 %v287
  %289 = vmatprep.subr.mxu0 0.0
  %v290 = vand.u32 %v24, 4294901760
  %v291 = vsub.f32 %v24, %v290
  %292 = vmatpush1.msra.mxu0 %v291
  %293 = vmatprep.subr.mxu0 0.0
  %v294 = vand.u32 %v25, 4294901760
  %v295 = vsub.f32 %v25, %v294
  %296 = vmatpush1.msra.mxu0 %v295
  %297 = vmatprep.subr.mxu0 0.0
  %v298 = vand.u32 %v26, 4294901760
  %v299 = vsub.f32 %v26, %v298
  %300 = vmatpush1.msra.mxu0 %v299
  %301 = vmatprep.subr.mxu0 0.0
  %v302 = vand.u32 %v27, 4294901760
  %v303 = vsub.f32 %v27, %v302
  %304 = vmatpush1.msra.mxu0 %v303
  %305 = vmatprep.subr.mxu0 0.0
  %v306 = vand.u32 %v28, 4294901760
  %v307 = vsub.f32 %v28, %v306
  %308 = vmatpush1.msra.mxu0 %v307
  %309 = vmatprep.subr.mxu0 0.0
  %v310 = vand.u32 %v29, 4294901760
  %v311 = vsub.f32 %v29, %v310
  %312 = vmatpush1.msra.mxu0 %v311
  %313 = vmatprep.subr.mxu0 0.0
  %v314 = vand.u32 %v30, 4294901760
  %v315 = vsub.f32 %v30, %v314
  %316 = vmatpush1.msra.mxu0 %v315
  %317 = vmatprep.subr.mxu0 0.0
  %v318 = vand.u32 %v31, 4294901760
  %v319 = vsub.f32 %v31, %v318
  %320 = vmatpush1.msra.mxu0 %v319
  %321 = vmatprep.subr.mxu0 0.0
  %v322 = vand.u32 %v32, 4294901760
  %v323 = vsub.f32 %v32, %v322
  %324 = vmatpush1.msra.mxu0 %v323
  %325 = vmatprep.subr.mxu0 0.0
  %v326 = vand.u32 %v33, 4294901760
  %v327 = vsub.f32 %v33, %v326
  %328 = vmatpush1.msra.mxu0 %v327
  %329 = vmatprep.subr.mxu0 0.0
  %v330 = vand.u32 %v34, 4294901760
  %v331 = vsub.f32 %v34, %v330
  %332 = vmatpush1.msra.mxu0 %v331
  %333 = vmatprep.subr.mxu0 0.0
  %v334 = vand.u32 %v35, 4294901760
  %v335 = vsub.f32 %v35, %v334
  %336 = vmatpush1.msra.mxu0 %v335
  %337 = vmatprep.subr.mxu0 0.0
  %v338 = vand.u32 %v36, 4294901760
  %v339 = vsub.f32 %v36, %v338
  %340 = vmatpush1.msra.mxu0 %v339
  %341 = vmatprep.subr.mxu0 0.0
  %v342 = vand.u32 %v37, 4294901760
  %v343 = vsub.f32 %v37, %v342
  %344 = vmatpush1.msra.mxu0 %v343
  %345 = vmatprep.subr.mxu0 0.0
  %346 = vmatpush1.msra.mxu0 0.0
  %347 = vmatprep.subr.mxu0 0.0
  %348 = vmatpush1.msra.mxu0 0.0
  %349 = vmatprep.subr.mxu0 0.0
  %350 = vmatpush1.msra.mxu0 0.0
  %351 = vmatprep.subr.mxu0 0.0
  %352 = vmatpush1.msra.mxu0 0.0
  %353 = vmatprep.subr.mxu0 0.0
  %354 = vmatpush1.msra.mxu0 0.0
  %355 = vmatprep.subr.mxu0 0.0
  %356 = vmatpush1.msra.mxu0 0.0
  %357 = vmatprep.subr.mxu0 0.0
  %358 = vmatpush1.msra.mxu0 0.0
  %359 = vmatprep.subr.mxu0 0.0
  %360 = vmatpush1.msra.mxu0 0.0
  %361 = vmatprep.subr.mxu0 0.0
  %362 = vmatpush1.msra.mxu0 0.0
  %363 = vmatprep.subr.mxu0 0.0
  %364 = vmatpush1.msra.mxu0 0.0
  %365 = vmatprep.subr.mxu0 0.0
  %366 = vmatpush1.msra.mxu0 0.0
  %367 = vmatprep.subr.mxu0 0.0
  %368 = vmatpush1.msra.mxu0 0.0
  %369 = vmatprep.subr.mxu0 0.0
  %370 = vmatpush1.msra.mxu0 0.0
  %371 = vmatprep.subr.mxu0 0.0
  %372 = vmatpush1.msra.mxu0 0.0
  %373 = vmatprep.subr.mxu0 0.0
  %374 = vmatpush1.msra.mxu0 0.0
  %375 = vmatprep.subr.mxu0 0.0
  %376 = vmatpush1.msra.mxu0 0.0
  %377 = vmatprep.mubr.f32.mxu0 0.0
  %v378 = vand.u32 %v21, 4294901760
  %v379 = vsub.f32 %v21, %v378
  %380 = vmatmul.mubr.f32.gmra.mrb[0].mxu0 %v379
  %v381 = vpop.f32.mrb[0].mxu0
  %v382 = vadd.f32 %v278, %v381
  %v383 = vpop.f32.mrb[0].mxu0
  %384 = vdwg.mxu0
  %385 = vmatprep.subr.mxu0 0.0
  %v386 = vand.u32 %v22, 4294901760
  %387 = vmatpush1.msra.mxu0 %v386
  %388 = vmatprep.subr.mxu0 0.0
  %v389 = vand.u32 %v23, 4294901760
  %390 = vmatpush1.msra.mxu0 %v389
  %391 = vmatprep.subr.mxu0 0.0
  %v392 = vand.u32 %v24, 4294901760
  %393 = vmatpush1.msra.mxu0 %v392
  %394 = vmatprep.subr.mxu0 0.0
  %v395 = vand.u32 %v25, 4294901760
  %396 = vmatpush1.msra.mxu0 %v395
  %397 = vmatprep.subr.mxu0 0.0
  %v398 = vand.u32 %v26, 4294901760
  %399 = vmatpush1.msra.mxu0 %v398
  %400 = vmatprep.subr.mxu0 0.0
  %v401 = vand.u32 %v27, 4294901760
  %402 = vmatpush1.msra.mxu0 %v401
  %403 = vmatprep.subr.mxu0 0.0
  %v404 = vand.u32 %v28, 4294901760
  %405 = vmatpush1.msra.mxu0 %v404
  %406 = vmatprep.subr.mxu0 0.0
  %v407 = vand.u32 %v29, 4294901760
  %408 = vmatpush1.msra.mxu0 %v407
  %409 = vmatprep.subr.mxu0 0.0
  %v410 = vand.u32 %v30, 4294901760
  %411 = vmatpush1.msra.mxu0 %v410
  %412 = vmatprep.subr.mxu0 0.0
  %v413 = vand.u32 %v31, 4294901760
  %414 = vmatpush1.msra.mxu0 %v413
  %415 = vmatprep.subr.mxu0 0.0
  %v416 = vand.u32 %v32, 4294901760
  %417 = vmatpush1.msra.mxu0 %v416
  %418 = vmatprep.subr.mxu0 0.0
  %v419 = vand.u32 %v33, 4294901760
  %420 = vmatpush1.msra.mxu0 %v419
  %421 = vmatprep.subr.mxu0 0.0
  %v422 = vand.u32 %v34, 4294901760
  %423 = vmatpush1.msra.mxu0 %v422
  %424 = vmatprep.subr.mxu0 0.0
  %v425 = vand.u32 %v35, 4294901760
  %426 = vmatpush1.msra.mxu0 %v425
  %427 = vmatprep.subr.mxu0 0.0
  %v428 = vand.u32 %v36, 4294901760
  %429 = vmatpush1.msra.mxu0 %v428
  %430 = vmatprep.subr.mxu0 0.0
  %v431 = vand.u32 %v37, 4294901760
  %432 = vmatpush1.msra.mxu0 %v431
  %433 = vmatprep.subr.mxu0 0.0
  %434 = vmatpush1.msra.mxu0 0.0
  %435 = vmatprep.subr.mxu0 0.0
  %436 = vmatpush1.msra.mxu0 0.0
  %437 = vmatprep.subr.mxu0 0.0
  %438 = vmatpush1.msra.mxu0 0.0
  %439 = vmatprep.subr.mxu0 0.0
  %440 = vmatpush1.msra.mxu0 0.0
  %441 = vmatprep.subr.mxu0 0.0
  %442 = vmatpush1.msra.mxu0 0.0
  %443 = vmatprep.subr.mxu0 0.0
  %444 = vmatpush1.msra.mxu0 0.0
  %445 = vmatprep.subr.mxu0 0.0
  %446 = vmatpush1.msra.mxu0 0.0
  %447 = vmatprep.subr.mxu0 0.0
  %448 = vmatpush1.msra.mxu0 0.0
  %449 = vmatprep.subr.mxu0 0.0
  %450 = vmatpush1.msra.mxu0 0.0
  %451 = vmatprep.subr.mxu0 0.0
  %452 = vmatpush1.msra.mxu0 0.0
  %453 = vmatprep.subr.mxu0 0.0
  %454 = vmatpush1.msra.mxu0 0.0
  %455 = vmatprep.subr.mxu0 0.0
  %456 = vmatpush1.msra.mxu0 0.0
  %457 = vmatprep.subr.mxu0 0.0
  %458 = vmatpush1.msra.mxu0 0.0
  %459 = vmatprep.subr.mxu0 0.0
  %460 = vmatpush1.msra.mxu0 0.0
  %461 = vmatprep.subr.mxu0 0.0
  %462 = vmatpush1.msra.mxu0 0.0
  %463 = vmatprep.subr.mxu0 0.0
  %464 = vmatpush1.msra.mxu0 0.0
  %465 = vmatprep.mubr.f32.mxu0 0.0
  %v466 = vand.u32 %v21, 4294901760
  %v467 = vsub.f32 %v21, %v466
  %v468 = vand.u32 %v467, 4294901760
  %469 = vmatmul.mubr.f32.gmra.mrb[0].mxu0 %v468
  %v470 = vpop.f32.mrb[0].mxu0
  %v471 = vadd.f32 %v382, %v470
  %v472 = vpop.f32.mrb[0].mxu0
  %473 = vdwg.mxu0
  %474 = vmatprep.subr.mxu0 0.0
  %v475 = vand.u32 %v22, 4294901760
  %v476 = vsub.f32 %v22, %v475
  %v477 = vand.u32 %v476, 4294901760
  %478 = vmatpush1.msra.mxu0 %v477
  %479 = vmatprep.subr.mxu0 0.0
  %v480 = vand.u32 %v23, 4294901760
  %v481 = vsub.f32 %v23, %v480
  %v482 = vand.u32 %v481, 4294901760
  %483 = vmatpush1.msra.mxu0 %v482
  %484 = vmatprep.subr.mxu0 0.0
  %v485 = vand.u32 %v24, 4294901760
  %v486 = vsub.f32 %v24, %v485
  %v487 = vand.u32 %v486, 4294901760
  %488 = vmatpush1.msra.mxu0 %v487
  %489 = vmatprep.subr.mxu0 0.0
  %v490 = vand.u32 %v25, 4294901760
  %v491 = vsub.f32 %v25, %v490
  %v492 = vand.u32 %v491, 4294901760
  %493 = vmatpush1.msra.mxu0 %v492
  %494 = vmatprep.subr.mxu0 0.0
  %v495 = vand.u32 %v26, 4294901760
  %v496 = vsub.f32 %v26, %v495
  %v497 = vand.u32 %v496, 4294901760
  %498 = vmatpush1.msra.mxu0 %v497
  %499 = vmatprep.subr.mxu0 0.0
  %v500 = vand.u32 %v27, 4294901760
  %v501 = vsub.f32 %v27, %v500
  %v502 = vand.u32 %v501, 4294901760
  %503 = vmatpush1.msra.mxu0 %v502
  %504 = vmatprep.subr.mxu0 0.0
  %v505 = vand.u32 %v28, 4294901760
  %v506 = vsub.f32 %v28, %v505
  %v507 = vand.u32 %v506, 4294901760
  %508 = vmatpush1.msra.mxu0 %v507
  %509 = vmatprep.subr.mxu0 0.0
  %v510 = vand.u32 %v29, 4294901760
  %v511 = vsub.f32 %v29, %v510
  %v512 = vand.u32 %v511, 4294901760
  %513 = vmatpush1.msra.mxu0 %v512
  %514 = vmatprep.subr.mxu0 0.0
  %v515 = vand.u32 %v30, 4294901760
  %v516 = vsub.f32 %v30, %v515
  %v517 = vand.u32 %v516, 4294901760
  %518 = vmatpush1.msra.mxu0 %v517
  %519 = vmatprep.subr.mxu0 0.0
  %v520 = vand.u32 %v31, 4294901760
  %v521 = vsub.f32 %v31, %v520
  %v522 = vand.u32 %v521, 4294901760
  %523 = vmatpush1.msra.mxu0 %v522
  %524 = vmatprep.subr.mxu0 0.0
  %v525 = vand.u32 %v32, 4294901760
  %v526 = vsub.f32 %v32, %v525
  %v527 = vand.u32 %v526, 4294901760
  %528 = vmatpush1.msra.mxu0 %v527
  %529 = vmatprep.subr.mxu0 0.0
  %v530 = vand.u32 %v33, 4294901760
  %v531 = vsub.f32 %v33, %v530
  %v532 = vand.u32 %v531, 4294901760
  %533 = vmatpush1.msra.mxu0 %v532
  %534 = vmatprep.subr.mxu0 0.0
  %v535 = vand.u32 %v34, 4294901760
  %v536 = vsub.f32 %v34, %v535
  %v537 = vand.u32 %v536, 4294901760
  %538 = vmatpush1.msra.mxu0 %v537
  %539 = vmatprep.subr.mxu0 0.0
  %v540 = vand.u32 %v35, 4294901760
  %v541 = vsub.f32 %v35, %v540
  %v542 = vand.u32 %v541, 4294901760
  %543 = vmatpush1.msra.mxu0 %v542
  %544 = vmatprep.subr.mxu0 0.0
  %v545 = vand.u32 %v36, 4294901760
  %v546 = vsub.f32 %v36, %v545
  %v547 = vand.u32 %v546, 4294901760
  %548 = vmatpush1.msra.mxu0 %v547
  %549 = vmatprep.subr.mxu0 0.0
  %v550 = vand.u32 %v37, 4294901760
  %v551 = vsub.f32 %v37, %v550
  %v552 = vand.u32 %v551, 4294901760
  %553 = vmatpush1.msra.mxu0 %v552
  %554 = vmatprep.subr.mxu0 0.0
  %555 = vmatpush1.msra.mxu0 0.0
  %556 = vmatprep.subr.mxu0 0.0
  %557 = vmatpush1.msra.mxu0 0.0
  %558 = vmatprep.subr.mxu0 0.0
  %559 = vmatpush1.msra.mxu0 0.0
  %560 = vmatprep.subr.mxu0 0.0
  %561 = vmatpush1.msra.mxu0 0.0
  %562 = vmatprep.subr.mxu0 0.0
  %563 = vmatpush1.msra.mxu0 0.0
  %564 = vmatprep.subr.mxu0 0.0
  %565 = vmatpush1.msra.mxu0 0.0
  %566 = vmatprep.subr.mxu0 0.0
  %567 = vmatpush1.msra.mxu0 0.0
  %568 = vmatprep.subr.mxu0 0.0
  %569 = vmatpush1.msra.mxu0 0.0
  %570 = vmatprep.subr.mxu0 0.0
  %571 = vmatpush1.msra.mxu0 0.0
  %572 = vmatprep.subr.mxu0 0.0
  %573 = vmatpush1.msra.mxu0 0.0
  %574 = vmatprep.subr.mxu0 0.0
  %575 = vmatpush1.msra.mxu0 0.0
  %576 = vmatprep.subr.mxu0 0.0
  %577 = vmatpush1.msra.mxu0 0.0
  %578 = vmatprep.subr.mxu0 0.0
  %579 = vmatpush1.msra.mxu0 0.0
  %580 = vmatprep.subr.mxu0 0.0
  %581 = vmatpush1.msra.mxu0 0.0
  %582 = vmatprep.subr.mxu0 0.0
  %583 = vmatpush1.msra.mxu0 0.0
  %584 = vmatprep.subr.mxu0 0.0
  %585 = vmatpush1.msra.mxu0 0.0
  %586 = vmatprep.mubr.f32.mxu0 0.0
  %v587 = vand.u32 %v21, 4294901760
  %588 = vmatmul.mubr.f32.gmra.mrb[0].mxu0 %v587
  %v589 = vpop.f32.mrb[0].mxu0
  %v590 = vadd.f32 %v471, %v589
  %v591 = vpop.f32.mrb[0].mxu0
  %592 = vdwg.mxu0
  %593 = vmatprep.subr.mxu0 0.0
  %v594 = vand.u32 %v22, 4294901760
  %595 = vmatpush1.msra.mxu0 %v594
  %596 = vmatprep.subr.mxu0 0.0
  %v597 = vand.u32 %v23, 4294901760
  %598 = vmatpush1.msra.mxu0 %v597
  %599 = vmatprep.subr.mxu0 0.0
  %v600 = vand.u32 %v24, 4294901760
  %601 = vmatpush1.msra.mxu0 %v600
  %602 = vmatprep.subr.mxu0 0.0
  %v603 = vand.u32 %v25, 4294901760
  %604 = vmatpush1.msra.mxu0 %v603
  %605 = vmatprep.subr.mxu0 0.0
  %v606 = vand.u32 %v26, 4294901760
  %607 = vmatpush1.msra.mxu0 %v606
  %608 = vmatprep.subr.mxu0 0.0
  %v609 = vand.u32 %v27, 4294901760
  %610 = vmatpush1.msra.mxu0 %v609
  %611 = vmatprep.subr.mxu0 0.0
  %v612 = vand.u32 %v28, 4294901760
  %613 = vmatpush1.msra.mxu0 %v612
  %614 = vmatprep.subr.mxu0 0.0
  %v615 = vand.u32 %v29, 4294901760
  %616 = vmatpush1.msra.mxu0 %v615
  %617 = vmatprep.subr.mxu0 0.0
  %v618 = vand.u32 %v30, 4294901760
  %619 = vmatpush1.msra.mxu0 %v618
  %620 = vmatprep.subr.mxu0 0.0
  %v621 = vand.u32 %v31, 4294901760
  %622 = vmatpush1.msra.mxu0 %v621
  %623 = vmatprep.subr.mxu0 0.0
  %v624 = vand.u32 %v32, 4294901760
  %625 = vmatpush1.msra.mxu0 %v624
  %626 = vmatprep.subr.mxu0 0.0
  %v627 = vand.u32 %v33, 4294901760
  %628 = vmatpush1.msra.mxu0 %v627
  %629 = vmatprep.subr.mxu0 0.0
  %v630 = vand.u32 %v34, 4294901760
  %631 = vmatpush1.msra.mxu0 %v630
  %632 = vmatprep.subr.mxu0 0.0
  %v633 = vand.u32 %v35, 4294901760
  %634 = vmatpush1.msra.mxu0 %v633
  %635 = vmatprep.subr.mxu0 0.0
  %v636 = vand.u32 %v36, 4294901760
  %637 = vmatpush1.msra.mxu0 %v636
  %638 = vmatprep.subr.mxu0 0.0
  %v639 = vand.u32 %v37, 4294901760
  %640 = vmatpush1.msra.mxu0 %v639
  %641 = vmatprep.subr.mxu0 0.0
  %642 = vmatpush1.msra.mxu0 0.0
  %643 = vmatprep.subr.mxu0 0.0
  %644 = vmatpush1.msra.mxu0 0.0
  %645 = vmatprep.subr.mxu0 0.0
  %646 = vmatpush1.msra.mxu0 0.0
  %647 = vmatprep.subr.mxu0 0.0
  %648 = vmatpush1.msra.mxu0 0.0
  %649 = vmatprep.subr.mxu0 0.0
  %650 = vmatpush1.msra.mxu0 0.0
  %651 = vmatprep.subr.mxu0 0.0
  %652 = vmatpush1.msra.mxu0 0.0
  %653 = vmatprep.subr.mxu0 0.0
  %654 = vmatpush1.msra.mxu0 0.0
  %655 = vmatprep.subr.mxu0 0.0
  %656 = vmatpush1.msra.mxu0 0.0
  %657 = vmatprep.subr.mxu0 0.0
  %658 = vmatpush1.msra.mxu0 0.0
  %659 = vmatprep.subr.mxu0 0.0
  %660 = vmatpush1.msra.mxu0 0.0
  %661 = vmatprep.subr.mxu0 0.0
  %662 = vmatpush1.msra.mxu0 0.0
  %663 = vmatprep.subr.mxu0 0.0
  %664 = vmatpush1.msra.mxu0 0.0
  %665 = vmatprep.subr.mxu0 0.0
  %666 = vmatpush1.msra.mxu0 0.0
  %667 = vmatprep.subr.mxu0 0.0
  %668 = vmatpush1.msra.mxu0 0.0
  %669 = vmatprep.subr.mxu0 0.0
  %670 = vmatpush1.msra.mxu0 0.0
  %671 = vmatprep.subr.mxu0 0.0
  %672 = vmatpush1.msra.mxu0 0.0
  %673 = vmatprep.mubr.f32.mxu0 0.0
  %v674 = vand.u32 %v21, 4294901760
  %675 = vmatmul.mubr.f32.gmra.mrb[0].mxu0 %v674
  %v676 = vpop.f32.mrb[0].mxu0
  %v677 = vadd.f32 %v590, %v676
  %v678 = vpop.f32.mrb[0].mxu0
  %679 = vdwg.mxu0
  %v680 = vmul.f32 %v677, 0.03125
  %v681 = vsub.f32 %v21, %v680
  %v682 = vmul.f32 %v681, %v681
  %683 = vmatprep.subr.mxu0 0.0
  %v684 = vand.u32 %v22, 4294901760
  %685 = vmatpush1.msra.mxu0 %v684
  %686 = vmatprep.subr.mxu0 0.0
  %v687 = vand.u32 %v23, 4294901760
  %688 = vmatpush1.msra.mxu0 %v687
  %689 = vmatprep.subr.mxu0 0.0
  %v690 = vand.u32 %v24, 4294901760
  %691 = vmatpush1.msra.mxu0 %v690
  %692 = vmatprep.subr.mxu0 0.0
  %v693 = vand.u32 %v25, 4294901760
  %694 = vmatpush1.msra.mxu0 %v693
  %695 = vmatprep.subr.mxu0 0.0
  %v696 = vand.u32 %v26, 4294901760
  %697 = vmatpush1.msra.mxu0 %v696
  %698 = vmatprep.subr.mxu0 0.0
  %v699 = vand.u32 %v27, 4294901760
  %700 = vmatpush1.msra.mxu0 %v699
  %701 = vmatprep.subr.mxu0 0.0
  %v702 = vand.u32 %v28, 4294901760
  %703 = vmatpush1.msra.mxu0 %v702
  %704 = vmatprep.subr.mxu0 0.0
  %v705 = vand.u32 %v29, 4294901760
  %706 = vmatpush1.msra.mxu0 %v705
  %707 = vmatprep.subr.mxu0 0.0
  %v708 = vand.u32 %v30, 4294901760
  %709 = vmatpush1.msra.mxu0 %v708
  %710 = vmatprep.subr.mxu0 0.0
  %v711 = vand.u32 %v31, 4294901760
  %712 = vmatpush1.msra.mxu0 %v711
  %713 = vmatprep.subr.mxu0 0.0
  %v714 = vand.u32 %v32, 4294901760
  %715 = vmatpush1.msra.mxu0 %v714
  %716 = vmatprep.subr.mxu0 0.0
  %v717 = vand.u32 %v33, 4294901760
  %718 = vmatpush1.msra.mxu0 %v717
  %719 = vmatprep.subr.mxu0 0.0
  %v720 = vand.u32 %v34, 4294901760
  %721 = vmatpush1.msra.mxu0 %v720
  %722 = vmatprep.subr.mxu0 0.0
  %v723 = vand.u32 %v35, 4294901760
  %724 = vmatpush1.msra.mxu0 %v723
  %725 = vmatprep.subr.mxu0 0.0
  %v726 = vand.u32 %v36, 4294901760
  %727 = vmatpush1.msra.mxu0 %v726
  %728 = vmatprep.subr.mxu0 0.0
  %v729 = vand.u32 %v37, 4294901760
  %730 = vmatpush1.msra.mxu0 %v729
  %731 = vmatprep.subr.mxu0 0.0
  %732 = vmatpush1.msra.mxu0 0.0
  %733 = vmatprep.subr.mxu0 0.0
  %734 = vmatpush1.msra.mxu0 0.0
  %735 = vmatprep.subr.mxu0 0.0
  %736 = vmatpush1.msra.mxu0 0.0
  %737 = vmatprep.subr.mxu0 0.0
  %738 = vmatpush1.msra.mxu0 0.0
  %739 = vmatprep.subr.mxu0 0.0
  %740 = vmatpush1.msra.mxu0 0.0
  %741 = vmatprep.subr.mxu0 0.0
  %742 = vmatpush1.msra.mxu0 0.0
  %743 = vmatprep.subr.mxu0 0.0
  %744 = vmatpush1.msra.mxu0 0.0
  %745 = vmatprep.subr.mxu0 0.0
  %746 = vmatpush1.msra.mxu0 0.0
  %747 = vmatprep.subr.mxu0 0.0
  %748 = vmatpush1.msra.mxu0 0.0
  %749 = vmatprep.subr.mxu0 0.0
  %750 = vmatpush1.msra.mxu0 0.0
  %751 = vmatprep.subr.mxu0 0.0
  %752 = vmatpush1.msra.mxu0 0.0
  %753 = vmatprep.subr.mxu0 0.0
  %754 = vmatpush1.msra.mxu0 0.0
  %755 = vmatprep.subr.mxu0 0.0
  %756 = vmatpush1.msra.mxu0 0.0
  %757 = vmatprep.subr.mxu0 0.0
  %758 = vmatpush1.msra.mxu0 0.0
  %759 = vmatprep.subr.mxu0 0.0
  %760 = vmatpush1.msra.mxu0 0.0
  %761 = vmatprep.subr.mxu0 0.0
  %762 = vmatpush1.msra.mxu0 0.0
  %763 = vmatprep.mubr.f32.mxu0 0.0
  %v764 = vand.u32 %v682, 4294901760
  %v765 = vsub.f32 %v682, %v764
  %v766 = vand.u32 %v765, 4294901760
  %v767 = vsub.f32 %v765, %v766
  %v768 = vand.u32 %v767, 4294901760
  %769 = vmatmul.mubr.f32.gmra.mrb[0].mxu0 %v768
  %v770 = vpop.f32.mrb[0].mxu0
  %v771 = vadd.f32 0.0, %v770
  %v772 = vpop.f32.mrb[0].mxu0
  %773 = vdwg.mxu0
  %774 = vmatprep.subr.mxu0 0.0
  %v775 = vand.u32 %v22, 4294901760
  %v776 = vsub.f32 %v22, %v775
  %v777 = vand.u32 %v776, 4294901760
  %v778 = vsub.f32 %v776, %v777
  %v779 = vand.u32 %v778, 4294901760
  %780 = vmatpush1.msra.mxu0 %v779
  %781 = vmatprep.subr.mxu0 0.0
  %v782 = vand.u32 %v23, 4294901760
  %v783 = vsub.f32 %v23, %v782
  %v784 = vand.u32 %v783, 4294901760
  %v785 = vsub.f32 %v783, %v784
  %v786 = vand.u32 %v785, 4294901760
  %787 = vmatpush1.msra.mxu0 %v786
  %788 = vmatprep.subr.mxu0 0.0
  %v789 = vand.u32 %v24, 4294901760
  %v790 = vsub.f32 %v24, %v789
  %v791 = vand.u32 %v790, 4294901760
  %v792 = vsub.f32 %v790, %v791
  %v793 = vand.u32 %v792, 4294901760
  %794 = vmatpush1.msra.mxu0 %v793
  %795 = vmatprep.subr.mxu0 0.0
  %v796 = vand.u32 %v25, 4294901760
  %v797 = vsub.f32 %v25, %v796
  %v798 = vand.u32 %v797, 4294901760
  %v799 = vsub.f32 %v797, %v798
  %v800 = vand.u32 %v799, 4294901760
  %801 = vmatpush1.msra.mxu0 %v800
  %802 = vmatprep.subr.mxu0 0.0
  %v803 = vand.u32 %v26, 4294901760
  %v804 = vsub.f32 %v26, %v803
  %v805 = vand.u32 %v804, 4294901760
  %v806 = vsub.f32 %v804, %v805
  %v807 = vand.u32 %v806, 4294901760
  %808 = vmatpush1.msra.mxu0 %v807
  %809 = vmatprep.subr.mxu0 0.0
  %v810 = vand.u32 %v27, 4294901760
  %v811 = vsub.f32 %v27, %v810
  %v812 = vand.u32 %v811, 4294901760
  %v813 = vsub.f32 %v811, %v812
  %v814 = vand.u32 %v813, 4294901760
  %815 = vmatpush1.msra.mxu0 %v814
  %816 = vmatprep.subr.mxu0 0.0
  %v817 = vand.u32 %v28, 4294901760
  %v818 = vsub.f32 %v28, %v817
  %v819 = vand.u32 %v818, 4294901760
  %v820 = vsub.f32 %v818, %v819
  %v821 = vand.u32 %v820, 4294901760
  %822 = vmatpush1.msra.mxu0 %v821
  %823 = vmatprep.subr.mxu0 0.0
  %v824 = vand.u32 %v29, 4294901760
  %v825 = vsub.f32 %v29, %v824
  %v826 = vand.u32 %v825, 4294901760
  %v827 = vsub.f32 %v825, %v826
  %v828 = vand.u32 %v827, 4294901760
  %829 = vmatpush1.msra.mxu0 %v828
  %830 = vmatprep.subr.mxu0 0.0
  %v831 = vand.u32 %v30, 4294901760
  %v832 = vsub.f32 %v30, %v831
  %v833 = vand.u32 %v832, 4294901760
  %v834 = vsub.f32 %v832, %v833
  %v835 = vand.u32 %v834, 4294901760
  %836 = vmatpush1.msra.mxu0 %v835
  %837 = vmatprep.subr.mxu0 0.0
  %v838 = vand.u32 %v31, 4294901760
  %v839 = vsub.f32 %v31, %v838
  %v840 = vand.u32 %v839, 4294901760
  %v841 = vsub.f32 %v839, %v840
  %v842 = vand.u32 %v841, 4294901760
  %843 = vmatpush1.msra.mxu0 %v842
  %844 = vmatprep.subr.mxu0 0.0
  %v845 = vand.u32 %v32, 4294901760
  %v846 = vsub.f32 %v32, %v845
  %v847 = vand.u32 %v846, 4294901760
  %v848 = vsub.f32 %v846, %v847
  %v849 = vand.u32 %v848, 4294901760
  %850 = vmatpush1.msra.mxu0 %v849
  %851 = vmatprep.subr.mxu0 0.0
  %v852 = vand.u32 %v33, 4294901760
  %v853 = vsub.f32 %v33, %v852
  %v854 = vand.u32 %v853, 4294901760
  %v855 = vsub.f32 %v853, %v854
  %v856 = vand.u32 %v855, 4294901760
  %857 = vmatpush1.msra.mxu0 %v856
  %858 = vmatprep.subr.mxu0 0.0
  %v859 = vand.u32 %v34, 4294901760
  %v860 = vsub.f32 %v34, %v859
  %v861 = vand.u32 %v860, 4294901760
  %v862 = vsub.f32 %v860, %v861
  %v863 = vand.u32 %v862, 4294901760
  %864 = vmatpush1.msra.mxu0 %v863
  %865 = vmatprep.subr.mxu0 0.0
  %v866 = vand.u32 %v35, 4294901760
  %v867 = vsub.f32 %v35, %v866
  %v868 = vand.u32 %v867, 4294901760
  %v869 = vsub.f32 %v867, %v868
  %v870 = vand.u32 %v869, 4294901760
  %871 = vmatpush1.msra.mxu0 %v870
  %872 = vmatprep.subr.mxu0 0.0
  %v873 = vand.u32 %v36, 4294901760
  %v874 = vsub.f32 %v36, %v873
  %v875 = vand.u32 %v874, 4294901760
  %v876 = vsub.f32 %v874, %v875
  %v877 = vand.u32 %v876, 4294901760
  %878 = vmatpush1.msra.mxu0 %v877
  %879 = vmatprep.subr.mxu0 0.0
  %v880 = vand.u32 %v37, 4294901760
  %v881 = vsub.f32 %v37, %v880
  %v882 = vand.u32 %v881, 4294901760
  %v883 = vsub.f32 %v881, %v882
  %v884 = vand.u32 %v883, 4294901760
  %885 = vmatpush1.msra.mxu0 %v884
  %886 = vmatprep.subr.mxu0 0.0
  %887 = vmatpush1.msra.mxu0 0.0
  %888 = vmatprep.subr.mxu0 0.0
  %889 = vmatpush1.msra.mxu0 0.0
  %890 = vmatprep.subr.mxu0 0.0
  %891 = vmatpush1.msra.mxu0 0.0
  %892 = vmatprep.subr.mxu0 0.0
  %893 = vmatpush1.msra.mxu0 0.0
  %894 = vmatprep.subr.mxu0 0.0
  %895 = vmatpush1.msra.mxu0 0.0
  %896 = vmatprep.subr.mxu0 0.0
  %897 = vmatpush1.msra.mxu0 0.0
  %898 = vmatprep.subr.mxu0 0.0
  %899 = vmatpush1.msra.mxu0 0.0
  %900 = vmatprep.subr.mxu0 0.0
  %901 = vmatpush1.msra.mxu0 0.0
  %902 = vmatprep.subr.mxu0 0.0
  %903 = vmatpush1.msra.mxu0 0.0
  %904 = vmatprep.subr.mxu0 0.0
  %905 = vmatpush1.msra.mxu0 0.0
  %906 = vmatprep.subr.mxu0 0.0
  %907 = vmatpush1.msra.mxu0 0.0
  %908 = vmatprep.subr.mxu0 0.0
  %909 = vmatpush1.msra.mxu0 0.0
  %910 = vmatprep.subr.mxu0 0.0
  %911 = vmatpush1.msra.mxu0 0.0
  %912 = vmatprep.subr.mxu0 0.0
  %913 = vmatpush1.msra.mxu0 0.0
  %914 = vmatprep.subr.mxu0 0.0
  %915 = vmatpush1.msra.mxu0 0.0
  %916 = vmatprep.subr.mxu0 0.0
  %917 = vmatpush1.msra.mxu0 0.0
  %918 = vmatprep.mubr.f32.mxu0 0.0
  %v919 = vand.u32 %v682, 4294901760
  %920 = vmatmul.mubr.f32.gmra.mrb[0].mxu0 %v919
  %v921 = vpop.f32.mrb[0].mxu0
  %v922 = vadd.f32 %v771, %v921
  %v923 = vpop.f32.mrb[0].mxu0
  %924 = vdwg.mxu0
  %925 = vmatprep.subr.mxu0 0.0
  %v926 = vand.u32 %v22, 4294901760
  %v927 = vsub.f32 %v22, %v926
  %928 = vmatpush1.msra.mxu0 %v927
  %929 = vmatprep.subr.mxu0 0.0
  %v930 = vand.u32 %v23, 4294901760
  %v931 = vsub.f32 %v23, %v930
  %932 = vmatpush1.msra.mxu0 %v931
  %933 = vmatprep.subr.mxu0 0.0
  %v934 = vand.u32 %v24, 4294901760
  %v935 = vsub.f32 %v24, %v934
  %936 = vmatpush1.msra.mxu0 %v935
  %937 = vmatprep.subr.mxu0 0.0
  %v938 = vand.u32 %v25, 4294901760
  %v939 = vsub.f32 %v25, %v938
  %940 = vmatpush1.msra.mxu0 %v939
  %941 = vmatprep.subr.mxu0 0.0
  %v942 = vand.u32 %v26, 4294901760
  %v943 = vsub.f32 %v26, %v942
  %944 = vmatpush1.msra.mxu0 %v943
  %945 = vmatprep.subr.mxu0 0.0
  %v946 = vand.u32 %v27, 4294901760
  %v947 = vsub.f32 %v27, %v946
  %948 = vmatpush1.msra.mxu0 %v947
  %949 = vmatprep.subr.mxu0 0.0
  %v950 = vand.u32 %v28, 4294901760
  %v951 = vsub.f32 %v28, %v950
  %952 = vmatpush1.msra.mxu0 %v951
  %953 = vmatprep.subr.mxu0 0.0
  %v954 = vand.u32 %v29, 4294901760
  %v955 = vsub.f32 %v29, %v954
  %956 = vmatpush1.msra.mxu0 %v955
  %957 = vmatprep.subr.mxu0 0.0
  %v958 = vand.u32 %v30, 4294901760
  %v959 = vsub.f32 %v30, %v958
  %960 = vmatpush1.msra.mxu0 %v959
  %961 = vmatprep.subr.mxu0 0.0
  %v962 = vand.u32 %v31, 4294901760
  %v963 = vsub.f32 %v31, %v962
  %964 = vmatpush1.msra.mxu0 %v963
  %965 = vmatprep.subr.mxu0 0.0
  %v966 = vand.u32 %v32, 4294901760
  %v967 = vsub.f32 %v32, %v966
  %968 = vmatpush1.msra.mxu0 %v967
  %969 = vmatprep.subr.mxu0 0.0
  %v970 = vand.u32 %v33, 4294901760
  %v971 = vsub.f32 %v33, %v970
  %972 = vmatpush1.msra.mxu0 %v971
  %973 = vmatprep.subr.mxu0 0.0
  %v974 = vand.u32 %v34, 4294901760
  %v975 = vsub.f32 %v34, %v974
  %976 = vmatpush1.msra.mxu0 %v975
  %977 = vmatprep.subr.mxu0 0.0
  %v978 = vand.u32 %v35, 4294901760
  %v979 = vsub.f32 %v35, %v978
  %980 = vmatpush1.msra.mxu0 %v979
  %981 = vmatprep.subr.mxu0 0.0
  %v982 = vand.u32 %v36, 4294901760
  %v983 = vsub.f32 %v36, %v982
  %984 = vmatpush1.msra.mxu0 %v983
  %985 = vmatprep.subr.mxu0 0.0
  %v986 = vand.u32 %v37, 4294901760
  %v987 = vsub.f32 %v37, %v986
  %988 = vmatpush1.msra.mxu0 %v987
  %989 = vmatprep.subr.mxu0 0.0
  %990 = vmatpush1.msra.mxu0 0.0
  %991 = vmatprep.subr.mxu0 0.0
  %992 = vmatpush1.msra.mxu0 0.0
  %993 = vmatprep.subr.mxu0 0.0
  %994 = vmatpush1.msra.mxu0 0.0
  %995 = vmatprep.subr.mxu0 0.0
  %996 = vmatpush1.msra.mxu0 0.0
  %997 = vmatprep.subr.mxu0 0.0
  %998 = vmatpush1.msra.mxu0 0.0
  %999 = vmatprep.subr.mxu0 0.0
  %1000 = vmatpush1.msra.mxu0 0.0
  %1001 = vmatprep.subr.mxu0 0.0
  %1002 = vmatpush1.msra.mxu0 0.0
  %1003 = vmatprep.subr.mxu0 0.0
  %1004 = vmatpush1.msra.mxu0 0.0
  %1005 = vmatprep.subr.mxu0 0.0
  %1006 = vmatpush1.msra.mxu0 0.0
  %1007 = vmatprep.subr.mxu0 0.0
  %1008 = vmatpush1.msra.mxu0 0.0
  %1009 = vmatprep.subr.mxu0 0.0
  %1010 = vmatpush1.msra.mxu0 0.0
  %1011 = vmatprep.subr.mxu0 0.0
  %1012 = vmatpush1.msra.mxu0 0.0
  %1013 = vmatprep.subr.mxu0 0.0
  %1014 = vmatpush1.msra.mxu0 0.0
  %1015 = vmatprep.subr.mxu0 0.0
  %1016 = vmatpush1.msra.mxu0 0.0
  %1017 = vmatprep.subr.mxu0 0.0
  %1018 = vmatpush1.msra.mxu0 0.0
  %1019 = vmatprep.subr.mxu0 0.0
  %1020 = vmatpush1.msra.mxu0 0.0
  %1021 = vmatprep.mubr.f32.mxu0 0.0
  %v1022 = vand.u32 %v682, 4294901760
  %v1023 = vsub.f32 %v682, %v1022
  %1024 = vmatmul.mubr.f32.gmra.mrb[0].mxu0 %v1023
  %v1025 = vpop.f32.mrb[0].mxu0
  %v1026 = vadd.f32 %v922, %v1025
  %v1027 = vpop.f32.mrb[0].mxu0
  %1028 = vdwg.mxu0
  %1029 = vmatprep.subr.mxu0 0.0
  %v1030 = vand.u32 %v22, 4294901760
  %1031 = vmatpush1.msra.mxu0 %v1030
  %1032 = vmatprep.subr.mxu0 0.0
  %v1033 = vand.u32 %v23, 4294901760
  %1034 = vmatpush1.msra.mxu0 %v1033
  %1035 = vmatprep.subr.mxu0 0.0
  %v1036 = vand.u32 %v24, 4294901760
  %1037 = vmatpush1.msra.mxu0 %v1036
  %1038 = vmatprep.subr.mxu0 0.0
  %v1039 = vand.u32 %v25, 4294901760
  %1040 = vmatpush1.msra.mxu0 %v1039
  %1041 = vmatprep.subr.mxu0 0.0
  %v1042 = vand.u32 %v26, 4294901760
  %1043 = vmatpush1.msra.mxu0 %v1042
  %1044 = vmatprep.subr.mxu0 0.0
  %v1045 = vand.u32 %v27, 4294901760
  %1046 = vmatpush1.msra.mxu0 %v1045
  %1047 = vmatprep.subr.mxu0 0.0
  %v1048 = vand.u32 %v28, 4294901760
  %1049 = vmatpush1.msra.mxu0 %v1048
  %1050 = vmatprep.subr.mxu0 0.0
  %v1051 = vand.u32 %v29, 4294901760
  %1052 = vmatpush1.msra.mxu0 %v1051
  %1053 = vmatprep.subr.mxu0 0.0
  %v1054 = vand.u32 %v30, 4294901760
  %1055 = vmatpush1.msra.mxu0 %v1054
  %1056 = vmatprep.subr.mxu0 0.0
  %v1057 = vand.u32 %v31, 4294901760
  %1058 = vmatpush1.msra.mxu0 %v1057
  %1059 = vmatprep.subr.mxu0 0.0
  %v1060 = vand.u32 %v32, 4294901760
  %1061 = vmatpush1.msra.mxu0 %v1060
  %1062 = vmatprep.subr.mxu0 0.0
  %v1063 = vand.u32 %v33, 4294901760
  %1064 = vmatpush1.msra.mxu0 %v1063
  %1065 = vmatprep.subr.mxu0 0.0
  %v1066 = vand.u32 %v34, 4294901760
  %1067 = vmatpush1.msra.mxu0 %v1066
  %1068 = vmatprep.subr.mxu0 0.0
  %v1069 = vand.u32 %v35, 4294901760
  %1070 = vmatpush1.msra.mxu0 %v1069
  %1071 = vmatprep.subr.mxu0 0.0
  %v1072 = vand.u32 %v36, 4294901760
  %1073 = vmatpush1.msra.mxu0 %v1072
  %1074 = vmatprep.subr.mxu0 0.0
  %v1075 = vand.u32 %v37, 4294901760
  %1076 = vmatpush1.msra.mxu0 %v1075
  %1077 = vmatprep.subr.mxu0 0.0
  %1078 = vmatpush1.msra.mxu0 0.0
  %1079 = vmatprep.subr.mxu0 0.0
  %1080 = vmatpush1.msra.mxu0 0.0
  %1081 = vmatprep.subr.mxu0 0.0
  %1082 = vmatpush1.msra.mxu0 0.0
  %1083 = vmatprep.subr.mxu0 0.0
  %1084 = vmatpush1.msra.mxu0 0.0
  %1085 = vmatprep.subr.mxu0 0.0
  %1086 = vmatpush1.msra.mxu0 0.0
  %1087 = vmatprep.subr.mxu0 0.0
  %1088 = vmatpush1.msra.mxu0 0.0
  %1089 = vmatprep.subr.mxu0 0.0
  %1090 = vmatpush1.msra.mxu0 0.0
  %1091 = vmatprep.subr.mxu0 0.0
  %1092 = vmatpush1.msra.mxu0 0.0
  %1093 = vmatprep.subr.mxu0 0.0
  %1094 = vmatpush1.msra.mxu0 0.0
  %1095 = vmatprep.subr.mxu0 0.0
  %1096 = vmatpush1.msra.mxu0 0.0
  %1097 = vmatprep.subr.mxu0 0.0
  %1098 = vmatpush1.msra.mxu0 0.0
  %1099 = vmatprep.subr.mxu0 0.0
  %1100 = vmatpush1.msra.mxu0 0.0
  %1101 = vmatprep.subr.mxu0 0.0
  %1102 = vmatpush1.msra.mxu0 0.0
  %1103 = vmatprep.subr.mxu0 0.0
  %1104 = vmatpush1.msra.mxu0 0.0
  %1105 = vmatprep.subr.mxu0 0.0
  %1106 = vmatpush1.msra.mxu0 0.0
  %1107 = vmatprep.subr.mxu0 0.0
  %1108 = vmatpush1.msra.mxu0 0.0
  %1109 = vmatprep.mubr.f32.mxu0 0.0
  %v1110 = vand.u32 %v682, 4294901760
  %v1111 = vsub.f32 %v682, %v1110
  %v1112 = vand.u32 %v1111, 4294901760
  %1113 = vmatmul.mubr.f32.gmra.mrb[0].mxu0 %v1112
  %v1114 = vpop.f32.mrb[0].mxu0
  %v1115 = vadd.f32 %v1026, %v1114
  %v1116 = vpop.f32.mrb[0].mxu0
  %1117 = vdwg.mxu0
  %1118 = vmatprep.subr.mxu0 0.0
  %v1119 = vand.u32 %v22, 4294901760
  %v1120 = vsub.f32 %v22, %v1119
  %v1121 = vand.u32 %v1120, 4294901760
  %1122 = vmatpush1.msra.mxu0 %v1121
  %1123 = vmatprep.subr.mxu0 0.0
  %v1124 = vand.u32 %v23, 4294901760
  %v1125 = vsub.f32 %v23, %v1124
  %v1126 = vand.u32 %v1125, 4294901760
  %1127 = vmatpush1.msra.mxu0 %v1126
  %1128 = vmatprep.subr.mxu0 0.0
  %v1129 = vand.u32 %v24, 4294901760
  %v1130 = vsub.f32 %v24, %v1129
  %v1131 = vand.u32 %v1130, 4294901760
  %1132 = vmatpush1.msra.mxu0 %v1131
  %1133 = vmatprep.subr.mxu0 0.0
  %v1134 = vand.u32 %v25, 4294901760
  %v1135 = vsub.f32 %v25, %v1134
  %v1136 = vand.u32 %v1135, 4294901760
  %1137 = vmatpush1.msra.mxu0 %v1136
  %1138 = vmatprep.subr.mxu0 0.0
  %v1139 = vand.u32 %v26, 4294901760
  %v1140 = vsub.f32 %v26, %v1139
  %v1141 = vand.u32 %v1140, 4294901760
  %1142 = vmatpush1.msra.mxu0 %v1141
  %1143 = vmatprep.subr.mxu0 0.0
  %v1144 = vand.u32 %v27, 4294901760
  %v1145 = vsub.f32 %v27, %v1144
  %v1146 = vand.u32 %v1145, 4294901760
  %1147 = vmatpush1.msra.mxu0 %v1146
  %1148 = vmatprep.subr.mxu0 0.0
  %v1149 = vand.u32 %v28, 4294901760
  %v1150 = vsub.f32 %v28, %v1149
  %v1151 = vand.u32 %v1150, 4294901760
  %1152 = vmatpush1.msra.mxu0 %v1151
  %1153 = vmatprep.subr.mxu0 0.0
  %v1154 = vand.u32 %v29, 4294901760
  %v1155 = vsub.f32 %v29, %v1154
  %v1156 = vand.u32 %v1155, 4294901760
  %1157 = vmatpush1.msra.mxu0 %v1156
  %1158 = vmatprep.subr.mxu0 0.0
  %v1159 = vand.u32 %v30, 4294901760
  %v1160 = vsub.f32 %v30, %v1159
  %v1161 = vand.u32 %v1160, 4294901760
  %1162 = vmatpush1.msra.mxu0 %v1161
  %1163 = vmatprep.subr.mxu0 0.0
  %v1164 = vand.u32 %v31, 4294901760
  %v1165 = vsub.f32 %v31, %v1164
  %v1166 = vand.u32 %v1165, 4294901760
  %1167 = vmatpush1.msra.mxu0 %v1166
  %1168 = vmatprep.subr.mxu0 0.0
  %v1169 = vand.u32 %v32, 4294901760
  %v1170 = vsub.f32 %v32, %v1169
  %v1171 = vand.u32 %v1170, 4294901760
  %1172 = vmatpush1.msra.mxu0 %v1171
  %1173 = vmatprep.subr.mxu0 0.0
  %v1174 = vand.u32 %v33, 4294901760
  %v1175 = vsub.f32 %v33, %v1174
  %v1176 = vand.u32 %v1175, 4294901760
  %1177 = vmatpush1.msra.mxu0 %v1176
  %1178 = vmatprep.subr.mxu0 0.0
  %v1179 = vand.u32 %v34, 4294901760
  %v1180 = vsub.f32 %v34, %v1179
  %v1181 = vand.u32 %v1180, 4294901760
  %1182 = vmatpush1.msra.mxu0 %v1181
  %1183 = vmatprep.subr.mxu0 0.0
  %v1184 = vand.u32 %v35, 4294901760
  %v1185 = vsub.f32 %v35, %v1184
  %v1186 = vand.u32 %v1185, 4294901760
  %1187 = vmatpush1.msra.mxu0 %v1186
  %1188 = vmatprep.subr.mxu0 0.0
  %v1189 = vand.u32 %v36, 4294901760
  %v1190 = vsub.f32 %v36, %v1189
  %v1191 = vand.u32 %v1190, 4294901760
  %1192 = vmatpush1.msra.mxu0 %v1191
  %1193 = vmatprep.subr.mxu0 0.0
  %v1194 = vand.u32 %v37, 4294901760
  %v1195 = vsub.f32 %v37, %v1194
  %v1196 = vand.u32 %v1195, 4294901760
  %1197 = vmatpush1.msra.mxu0 %v1196
  %1198 = vmatprep.subr.mxu0 0.0
  %1199 = vmatpush1.msra.mxu0 0.0
  %1200 = vmatprep.subr.mxu0 0.0
  %1201 = vmatpush1.msra.mxu0 0.0
  %1202 = vmatprep.subr.mxu0 0.0
  %1203 = vmatpush1.msra.mxu0 0.0
  %1204 = vmatprep.subr.mxu0 0.0
  %1205 = vmatpush1.msra.mxu0 0.0
  %1206 = vmatprep.subr.mxu0 0.0
  %1207 = vmatpush1.msra.mxu0 0.0
  %1208 = vmatprep.subr.mxu0 0.0
  %1209 = vmatpush1.msra.mxu0 0.0
  %1210 = vmatprep.subr.mxu0 0.0
  %1211 = vmatpush1.msra.mxu0 0.0
  %1212 = vmatprep.subr.mxu0 0.0
  %1213 = vmatpush1.msra.mxu0 0.0
  %1214 = vmatprep.subr.mxu0 0.0
  %1215 = vmatpush1.msra.mxu0 0.0
  %1216 = vmatprep.subr.mxu0 0.0
  %1217 = vmatpush1.msra.mxu0 0.0
  %1218 = vmatprep.subr.mxu0 0.0
  %1219 = vmatpush1.msra.mxu0 0.0
  %1220 = vmatprep.subr.mxu0 0.0
  %1221 = vmatpush1.msra.mxu0 0.0
  %1222 = vmatprep.subr.mxu0 0.0
  %1223 = vmatpush1.msra.mxu0 0.0
  %1224 = vmatprep.subr.mxu0 0.0
  %1225 = vmatpush1.msra.mxu0 0.0
  %1226 = vmatprep.subr.mxu0 0.0
  %1227 = vmatpush1.msra.mxu0 0.0
  %1228 = vmatprep.subr.mxu0 0.0
  %1229 = vmatpush1.msra.mxu0 0.0
  %1230 = vmatprep.mubr.f32.mxu0 0.0
  %v1231 = vand.u32 %v682, 4294901760
  %1232 = vmatmul.mubr.f32.gmra.mrb[0].mxu0 %v1231
  %v1233 = vpop.f32.mrb[0].mxu0
  %v1234 = vadd.f32 %v1115, %v1233
  %v1235 = vpop.f32.mrb[0].mxu0
  %1236 = vdwg.mxu0
  %1237 = vmatprep.subr.mxu0 0.0
  %v1238 = vand.u32 %v22, 4294901760
  %1239 = vmatpush1.msra.mxu0 %v1238
  %1240 = vmatprep.subr.mxu0 0.0
  %v1241 = vand.u32 %v23, 4294901760
  %1242 = vmatpush1.msra.mxu0 %v1241
  %1243 = vmatprep.subr.mxu0 0.0
  %v1244 = vand.u32 %v24, 4294901760
  %1245 = vmatpush1.msra.mxu0 %v1244
  %1246 = vmatprep.subr.mxu0 0.0
  %v1247 = vand.u32 %v25, 4294901760
  %1248 = vmatpush1.msra.mxu0 %v1247
  %1249 = vmatprep.subr.mxu0 0.0
  %v1250 = vand.u32 %v26, 4294901760
  %1251 = vmatpush1.msra.mxu0 %v1250
  %1252 = vmatprep.subr.mxu0 0.0
  %v1253 = vand.u32 %v27, 4294901760
  %1254 = vmatpush1.msra.mxu0 %v1253
  %1255 = vmatprep.subr.mxu0 0.0
  %v1256 = vand.u32 %v28, 4294901760
  %1257 = vmatpush1.msra.mxu0 %v1256
  %1258 = vmatprep.subr.mxu0 0.0
  %v1259 = vand.u32 %v29, 4294901760
  %1260 = vmatpush1.msra.mxu0 %v1259
  %1261 = vmatprep.subr.mxu0 0.0
  %v1262 = vand.u32 %v30, 4294901760
  %1263 = vmatpush1.msra.mxu0 %v1262
  %1264 = vmatprep.subr.mxu0 0.0
  %v1265 = vand.u32 %v31, 4294901760
  %1266 = vmatpush1.msra.mxu0 %v1265
  %1267 = vmatprep.subr.mxu0 0.0
  %v1268 = vand.u32 %v32, 4294901760
  %1269 = vmatpush1.msra.mxu0 %v1268
  %1270 = vmatprep.subr.mxu0 0.0
  %v1271 = vand.u32 %v33, 4294901760
  %1272 = vmatpush1.msra.mxu0 %v1271
  %1273 = vmatprep.subr.mxu0 0.0
  %v1274 = vand.u32 %v34, 4294901760
  %1275 = vmatpush1.msra.mxu0 %v1274
  %1276 = vmatprep.subr.mxu0 0.0
  %v1277 = vand.u32 %v35, 4294901760
  %1278 = vmatpush1.msra.mxu0 %v1277
  %1279 = vmatprep.subr.mxu0 0.0
  %v1280 = vand.u32 %v36, 4294901760
  %1281 = vmatpush1.msra.mxu0 %v1280
  %1282 = vmatprep.subr.mxu0 0.0
  %v1283 = vand.u32 %v37, 4294901760
  %1284 = vmatpush1.msra.mxu0 %v1283
  %1285 = vmatprep.subr.mxu0 0.0
  %1286 = vmatpush1.msra.mxu0 0.0
  %1287 = vmatprep.subr.mxu0 0.0
  %1288 = vmatpush1.msra.mxu0 0.0
  %1289 = vmatprep.subr.mxu0 0.0
  %1290 = vmatpush1.msra.mxu0 0.0
  %1291 = vmatprep.subr.mxu0 0.0
  %1292 = vmatpush1.msra.mxu0 0.0
  %1293 = vmatprep.subr.mxu0 0.0
  %1294 = vmatpush1.msra.mxu0 0.0
  %1295 = vmatprep.subr.mxu0 0.0
  %1296 = vmatpush1.msra.mxu0 0.0
  %1297 = vmatprep.subr.mxu0 0.0
  %1298 = vmatpush1.msra.mxu0 0.0
  %1299 = vmatprep.subr.mxu0 0.0
  %1300 = vmatpush1.msra.mxu0 0.0
  %1301 = vmatprep.subr.mxu0 0.0
  %1302 = vmatpush1.msra.mxu0 0.0
  %1303 = vmatprep.subr.mxu0 0.0
  %1304 = vmatpush1.msra.mxu0 0.0
  %1305 = vmatprep.subr.mxu0 0.0
  %1306 = vmatpush1.msra.mxu0 0.0
  %1307 = vmatprep.subr.mxu0 0.0
  %1308 = vmatpush1.msra.mxu0 0.0
  %1309 = vmatprep.subr.mxu0 0.0
  %1310 = vmatpush1.msra.mxu0 0.0
  %1311 = vmatprep.subr.mxu0 0.0
  %1312 = vmatpush1.msra.mxu0 0.0
  %1313 = vmatprep.subr.mxu0 0.0
  %1314 = vmatpush1.msra.mxu0 0.0
  %1315 = vmatprep.subr.mxu0 0.0
  %1316 = vmatpush1.msra.mxu0 0.0
  %1317 = vmatprep.mubr.f32.mxu0 0.0
  %v1318 = vand.u32 %v682, 4294901760
  %1319 = vmatmul.mubr.f32.gmra.mrb[0].mxu0 %v1318
  %v1320 = vpop.f32.mrb[0].mxu0
  %v1321 = vadd.f32 %v1234, %v1320
  %v1322 = vpop.f32.mrb[0].mxu0
  %1323 = vdwg.mxu0
  %v1324 = vmul.f32 %v1321, 0.032258064
  %v1325 = vrsqrt.pop %v1324
  %v1326 = vmul.f32 %v1324, %v1325
  %vm1327 = vcmp.eq.f32.partialorder %v1324, inf
  %v1328 = vsel %vm1327, %v1324, %v1326
  %vm1329 = vcmp.eq.f32.partialorder %v1324, 0.0
  %v1330 = vand.u32 %v1324, 2147483648
  %v1331 = vsel %vm1329, %v1330, %v1328
  %v1332 = vadd.f32 %v1331, 1e-05
  %v1333 = vrcp.pop %v1332
  %v1334 = vmul.f32 %v1332, %v1333
  %v1335 = vsub.f32 2.0, %v1334
  %v1336 = vmul.f32 %v1333, %v1335
  %v1337 = vstv %s38
  %v1338 = vmul.f32 %v1337, %v1336
  %v1339 = vmul.f32 %v1338, %v681
  %v1340 = vtanh.pop %v1339
  %v1341 = vld [vmem:[%s1] sm:$0x1]
  %v1343 = vlaneseq
  %v1344 = vshrl.u32 %v1343, 7
  %v1345 = vsub.s32 0, %v1344
  %v1346 = vrot.slane %v1341, %v1345
  %v1348 = vmul.f32 %v1340, %v1346
  %v1349 = vld [vmem:[%s2] sm:$0x1]
  %v1351 = vlaneseq
  %v1352 = vshrl.u32 %v1351, 7
  %v1353 = vsub.s32 0, %v1352
  %v1354 = vrot.slane %v1349, %v1353
  %v1356 = vadd.f32 %v1348, %v1354
  %1357 = vst [vmem:[%s5] sm:$0xff] %v1356
  // Predicated region
  $region22: #{dyt_forward.1} parent=0 // pred_check
    _
  $region23: #{dyt_forward.1} parent=0 // pred_check_branch
    %1359 = sbr.rel (0) target = $region25
  $region24: #{dyt_forward.1} parent=0 // pred_region
    _
  $region25: #{dyt_forward.1} parent=0 // pred_fallthru
    _
  // Predicated region
  $region26: #{dyt_forward.1} parent=0 // pred_check
    _
  $region27: #{dyt_forward.1} parent=0 // pred_check_branch
    %1361 = sbr.rel (0) target = $region29
  $region28: #{dyt_forward.1} parent=0 // pred_region
    _
  $region29: #{dyt_forward.1} parent=0 // pred_fallthru
    _

</llo_original>
